<compile_context>
chip_gen: v7x
topology: tpu7x:2x2x1
jax: 0.10.0
libtpu: 0.0.40
codegen_flags: <defaults>
</compile_context>

<pallas_src>
import functools

import jax
import jax.numpy as jnp
from jax.experimental import pallas as pl
from jax.experimental.pallas import tpu as pltpu


def _dense_kernel(*refs, has_g):
    """One (tm, tn) output tile of y = x @ (g * w) + b, accumulated over K tiles.

    refs = (x_ref, w_ref, [g_ref,] b_ref, o_ref, acc_ref)
      x_ref:   (tm, tk)       row / K tile of the input
      w_ref:   (tk, tn)       K / F tile of the weight (v if has_g)
      g_ref:   (1,  tn)       per-output-feature scale (weight_fact), optional
      b_ref:   (1,  tn)       bias tile
      o_ref:   (tm, tn)       output tile (written once, at the last K step)
      acc_ref: (tm, tn) f32   VMEM accumulator scratch
    """
    if has_g:
        x_ref, w_ref, g_ref, b_ref, o_ref, acc_ref = refs
    else:
        x_ref, w_ref, b_ref, o_ref, acc_ref = refs
        g_ref = None

    k = pl.program_id(2)

    @pl.when(k == 0)
    def _():
        acc_ref[...] = jnp.zeros_like(acc_ref)

    w = w_ref[...]
    if g_ref is not None:
        # weight_fact: kernel = g * v, folded into the kernel so the full K*F weight is
        # never round-tripped through HBM by a separate XLA op.  VPU work, free filler.
        w = w * g_ref[...].astype(w.dtype)

    acc_ref[...] += jnp.dot(x_ref[...], w, preferred_element_type=jnp.float32)

    @pl.when(k == pl.num_programs(2) - 1)
    def _():
        o_ref[...] = (acc_ref[...] + b_ref[...].astype(jnp.float32)).astype(o_ref.dtype)


def _vmem_capacity_bytes():
    try:
        cap = getattr(pltpu.get_tpu_info(), "vmem_capacity_bytes", None)
        if cap:
            return int(cap)
    except Exception:
        pass
    return 64 * 1024 * 1024  # conservative fallback: v7x per-TC physical VMEM


def dense_forward(x, kernel, bias, g=None, *, tm=1024):
    """Pallas Dense forward: y = x @ (g * kernel) + bias   (g optional, per-feature).

    Args:
      x:      (..., input_dim)
      kernel: (input_dim, features)   (this is `v` when g is given)
      bias:   (features,)
      g:      optional (features,) weight_fact scale
    Returns:
      y:      (..., features), dtype of x.
    """
    *lead, input_dim = x.shape
    k_in, features = kernel.shape
    assert k_in == input_dim, (k_in, input_dim)
    assert bias.shape == (features,), bias.shape
    if g is not None:
        assert g.shape == (features,), g.shape

    n = 1
    for d in lead:
        n *= d
    x2d = x.reshape(n, input_dim)

    itemsize = jnp.dtype(x.dtype).itemsize
    out_isz = itemsize

    # ---- lane-dense output folding -------------------------------------------------
    # Sub-128-lane output tiles lower to masked partial stores (vst.msk).  Fold r rows
    # into the lane dimension via a block-diagonal weight so the output tile is a full
    # 128 lanes.  Only done while the folded weight stays tiny (it is r^2 larger).
    r = 1
    if 0 < features < 128 and 128 % features == 0 and input_dim > 0:
        r_cand = 128 // features
        folded_w_bytes = (r_cand * input_dim) * (r_cand * features) * itemsize
        if folded_w_bytes <= 2 * 1024 * 1024:
            r = r_cand

    if r > 1:
        n_pad = ((n + r - 1) // r) * r
        if n_pad != n:
            x2d = jnp.pad(x2d, ((0, n_pad - n), (0, 0)))
        x_in = x2d.reshape(n_pad // r, r * input_dim)          # contiguous, free view
        w_in = jnp.kron(jnp.eye(r, dtype=kernel.dtype), kernel)  # (r*K, r*F) block-diag
        b_in = jnp.tile(bias, r).reshape(1, r * features)
        g_in = None if g is None else jnp.tile(g, r).reshape(1, r * features)
        n_rows, k_eff, f_eff = n_pad // r, r * input_dim, r * features
    else:
        x_in = x2d
        w_in = kernel
        b_in = bias.reshape(1, features)
        g_in = None if g is None else g.reshape(1, features)
        n_rows, k_eff, f_eff = n, input_dim, features

    # ---- generation-aware VMEM budget ------------------------------------------------
    phys_vmem = _vmem_capacity_bytes()
    vmem_limit = min(3 * phys_vmem // 4, 96 * 1024 * 1024)  # 48 MiB on v7x, 96 MiB v5e/v6e
    budget = min(5 * phys_vmem // 8, 80 * 1024 * 1024)      # double-buffered tile budget

    # ---- tile selection ----------------------------------------------------------------
    # F (lane) axis.
    if f_eff % 128 == 0 and f_eff > 512:
        tn = 512
    else:
        tn = f_eff
    # K (contraction) axis: only tiled when the weight tile would blow the budget AND K
    # divides cleanly (a ragged K tile would feed garbage into the reduction).
    tk = k_eff
    max_w_bytes = budget // 4
    if 2 * k_eff * tn * itemsize > max_w_bytes:
        for cand in (1024, 512, 256, 128):
            if k_eff % cand == 0 and 2 * cand * tn * itemsize <= max_w_bytes:
                tk = cand
                break
        # TODO(synk): K not 128-aligned and still over budget would need a wrapper-side
        # zero-pad of K; kept un-tiled here for correctness.

    # Row axis: biggest tile the budget allows, sublane aligned; also capped so there are
    # at least 2 row steps, letting the 'parallel' row axis use both v7x TensorCores.
    fixed = 2 * tk * tn * itemsize + 4 * tn * itemsize       # weight + (bias, g), 2x buffered
    per_row = 2 * tk * itemsize + 2 * tn * out_isz + 4 * tn  # x + out (2x) + f32 accumulator
    tm_cap = max(8, (budget - fixed) // per_row)
    tm = int(min(tm, tm_cap))
    if n_rows >= 16:
        half = (n_rows + 1) // 2
        tm = min(tm, ((half + 7) // 8) * 8)
    if n_rows <= 8:
        tm = n_rows
    else:
        tm = max(8, (tm // 8) * 8)
        tm = min(tm, ((n_rows + 7) // 8) * 8)

    grid = (pl.cdiv(n_rows, tm), pl.cdiv(f_eff, tn), pl.cdiv(k_eff, tk))

    in_specs = [
        pl.BlockSpec((tm, tk), lambda i, j, k: (i, k)),
        pl.BlockSpec((tk, tn), lambda i, j, k: (k, j)),
    ]
    inputs = [x_in, w_in]
    if g_in is not None:
        in_specs.append(pl.BlockSpec((1, tn), lambda i, j, k: (0, j)))
        inputs.append(g_in)
    in_specs.append(pl.BlockSpec((1, tn), lambda i, j, k: (0, j)))
    inputs.append(b_in)

    cost = pl.CostEstimate(
        flops=int(2 * n * input_dim * features),
        transcendentals=0,
        bytes_accessed=int(
            itemsize * (n * input_dim + input_dim * features + features)
            + out_isz * n * features
        ),
    )

    out = pl.pallas_call(
        functools.partial(_dense_kernel, has_g=g_in is not None),
        out_shape=jax.ShapeDtypeStruct((n_rows, f_eff), x.dtype),
        grid_spec=pltpu.PrefetchScalarGridSpec(
            num_scalar_prefetch=0,
            grid=grid,
            in_specs=in_specs,
            out_specs=pl.BlockSpec((tm, tn), lambda i, j, k: (i, j)),
            scratch_shapes=[pltpu.VMEM((tm, tn), jnp.float32)],
        ),
        compiler_params=pltpu.CompilerParams(
            dimension_semantics=("parallel", "parallel", "arbitrary"),
            vmem_limit_bytes=int(vmem_limit),
        ),
        cost_estimate=cost,
    )(*inputs)

    if r > 1:
        out = out.reshape(n_rows * r, features)[:n]
    return out.reshape(*lead, features)


def dense_apply(params, x, *, reparam=None, tm=1024):
    """Mirrors Dense.forward, including the weight_fact reparameterization."""
    if reparam is not None and reparam["type"] == "weight_fact":
        # g * v is applied INSIDE the kernel (no extra HBM round trip of the weight).
        return dense_forward(x, params["v"], params["bias"], g=params["g"], tm=tm)
    return dense_forward(x, params["kernel"], params["bias"], tm=tm)


if __name__ == "__main__":
    key = jax.random.PRNGKey(0)
    k1, k2, k3, k4, k5, k6, k7 = jax.random.split(key, 7)

    # ---------------- Test 1: plain Dense (reparam=None), F<128 -> lane-dense fold ----
    input_dim, features = 32, 32
    x = jax.random.normal(k1, (2, 8, input_dim), dtype=jnp.float32)
    kernel = jax.random.normal(k2, (input_dim, features), dtype=jnp.float32) * 0.1
    bias = jax.random.normal(k3, (features,), dtype=jnp.float32) * 0.1
    params = {"kernel": kernel, "bias": bias}

    y = dense_apply(params, x, reparam=None)
    y = jax.block_until_ready(y)
    y_ref = x @ kernel + bias
    assert y.shape == (2, 8, features), y.shape
    assert jnp.allclose(y, y_ref, atol=1e-5, rtol=1e-5)

    # ---------------- Test 2: weight_fact reparam (g applied in-kernel) ---------------
    input_dim2, features2 = 4, 128
    reparam = {"type": "weight_fact", "mean": 1.0, "stddev": 0.1}
    x2 = jax.random.normal(k4, (2, 8, input_dim2), dtype=jnp.float32)
    w0 = jax.random.normal(k5, (input_dim2, features2), dtype=jnp.float32) * 0.1
    g = jnp.exp(reparam["mean"] + reparam["stddev"]
                * jax.random.normal(k6, (features2,), dtype=jnp.float32))
    v = w0 / g
    bias2 = jnp.zeros((features2,), dtype=jnp.float32)
    params2 = {"g": g, "v": v, "bias": bias2}

    y2 = dense_apply(params2, x2, reparam=reparam)
    y2 = jax.block_until_ready(y2)
    y2_ref = x2 @ (g * v) + bias2
    assert y2.shape == (2, 8, features2), y2.shape
    assert jnp.allclose(y2, y2_ref, atol=1e-5, rtol=1e-5)

    # ---------------- Test 3: ragged row count (exercises fold row padding) -----------
    x3 = jax.random.normal(k7, (3, 5, input_dim), dtype=jnp.float32)
    y3 = jax.block_until_ready(dense_apply(params, x3, reparam=None))
    y3_ref = x3 @ kernel + bias
    assert y3.shape == (3, 5, features), y3.shape
    assert jnp.allclose(y3, y3_ref, atol=1e-5, rtol=1e-5)

    print("KERNEL_OK")
</pallas_src>

<mosaic_0001>
module attributes {stable_mosaic.version = 11 : i64} {
  func.func @_dense_kernel(%arg0: i32, %arg1: i32, %arg2: i32, %arg3: memref<4x128xf32, #tpu.memory_space<vmem>>, %arg4: memref<128x128xf32, #tpu.memory_space<vmem>>, %arg5: memref<1x128xf32, #tpu.memory_space<vmem>>, %arg6: memref<4x128xf32, #tpu.memory_space<vmem>>, %arg7: memref<4x128xf32, #tpu.memory_space<vmem>>) attributes {dimension_semantics = [#tpu.dimension_semantics<parallel>, #tpu.dimension_semantics<parallel>, #tpu.dimension_semantics<arbitrary>], iteration_bounds = array<i64: 1, 1, 1>, scalar_prefetch = 0 : i64, scratch_operands = 1 : i64, tpu.core_type = #tpu.core_type<tc>, window_params = [{transform_indices = @transform_0, window_bounds = array<i64: 4, 128>}, {transform_indices = @transform_1, window_bounds = array<i64: 128, 128>}, {transform_indices = @transform_2, window_bounds = array<i64: 1, 128>}, {transform_indices = @transform_3, window_bounds = array<i64: 4, 128>}]} {
    %c0_i32 = arith.constant 0 : i32
    %0 = arith.cmpi eq, %arg2, %c0_i32 : i32
    %1 = arith.extui %0 : i1 to i32
    %c0_i32_0 = arith.constant 0 : i32
    %2 = arith.cmpi ne, %1, %c0_i32_0 : i32
    scf.if %2 {
      %cst_10 = arith.constant 0.000000e+00 : f32
      %12 = vector.broadcast %cst_10 : f32 to vector<4x128xf32>
      %c0_11 = arith.constant 0 : index
      %c0_12 = arith.constant 0 : index
      %13 = vector.load %arg7[%c0_11, %c0_12] : memref<4x128xf32, #tpu.memory_space<vmem>>, vector<4x128xf32>
      tpu.vector_store %arg7[%c0_11, %c0_12], %12 {strides = array<i32>} : memref<4x128xf32, #tpu.memory_space<vmem>>, vector<4x128xf32>,
    } else {
    }
    %c0 = arith.constant 0 : index
    %c0_1 = arith.constant 0 : index
    %3 = vector.load %arg4[%c0, %c0_1] : memref<128x128xf32, #tpu.memory_space<vmem>>, vector<128x128xf32>
    %c0_2 = arith.constant 0 : index
    %c0_3 = arith.constant 0 : index
    %4 = vector.load %arg7[%c0_2, %c0_3] : memref<4x128xf32, #tpu.memory_space<vmem>>, vector<4x128xf32>
    %c0_4 = arith.constant 0 : index
    %c0_5 = arith.constant 0 : index
    %5 = vector.load %arg3[%c0_4, %c0_5] : memref<4x128xf32, #tpu.memory_space<vmem>>, vector<4x128xf32>
    %cst = arith.constant dense<0.000000e+00> : vector<4x128xf32>
    %6 = tpu.matmul %5, %3, %cst {dimension_numbers = #tpu.dot_dimension_numbers<[1], [0], [0], [1], [0, 0, 1, 1], [], []>} : vector<4x128xf32>, vector<128x128xf32>, vector<4x128xf32> -> vector<4x128xf32>
    %7 = arith.addf %4, %6 : vector<4x128xf32>
    %c0_6 = arith.constant 0 : index
    %c0_7 = arith.constant 0 : index
    %8 = vector.load %arg7[%c0_6, %c0_7] : memref<4x128xf32, #tpu.memory_space<vmem>>, vector<4x128xf32>
    tpu.vector_store %arg7[%c0_6, %c0_7], %7 {strides = array<i32>} : memref<4x128xf32, #tpu.memory_space<vmem>>, vector<4x128xf32>,
    %c0_i32_8 = arith.constant 0 : i32
    %9 = arith.cmpi eq, %arg2, %c0_i32_8 : i32
    %10 = arith.extui %9 : i1 to i32
    %c0_i32_9 = arith.constant 0 : i32
    %11 = arith.cmpi ne, %10, %c0_i32_9 : i32
    scf.if %11 {
      %c0_10 = arith.constant 0 : index
      %c0_11 = arith.constant 0 : index
      %12 = vector.load %arg7[%c0_10, %c0_11] : memref<4x128xf32, #tpu.memory_space<vmem>>, vector<4x128xf32>
      %c0_12 = arith.constant 0 : index
      %c0_13 = arith.constant 0 : index
      %13 = vector.load %arg5[%c0_12, %c0_13] : memref<1x128xf32, #tpu.memory_space<vmem>>, vector<1x128xf32>
      %14 = vector.broadcast %13 : vector<1x128xf32> to vector<4x128xf32>
      %15 = arith.addf %12, %14 : vector<4x128xf32>
      %c0_14 = arith.constant 0 : index
      %c0_15 = arith.constant 0 : index
      %16 = vector.load %arg6[%c0_14, %c0_15] : memref<4x128xf32, #tpu.memory_space<vmem>>, vector<4x128xf32>
      tpu.vector_store %arg6[%c0_14, %c0_15], %15 {strides = array<i32>} : memref<4x128xf32, #tpu.memory_space<vmem>>, vector<4x128xf32>,
    } else {
    }
    return
  }
  func.func @transform_0(%arg0: i32, %arg1: i32, %arg2: i32) -> (i32, i32) {
    %c0_i32 = arith.constant 0 : i32
    return %arg0, %arg2 : i32, i32
  }
  func.func @transform_1(%arg0: i32, %arg1: i32, %arg2: i32) -> (i32, i32) {
    %c0_i32 = arith.constant 0 : i32
    return %arg2, %arg1 : i32, i32
  }
  func.func @transform_2(%arg0: i32, %arg1: i32, %arg2: i32) -> (i32, i32) {
    %c0_i32 = arith.constant 0 : i32
    %c0_i32_0 = arith.constant 0 : i32
    return %c0_i32, %arg1 : i32, i32
  }
  func.func @transform_3(%arg0: i32, %arg1: i32, %arg2: i32) -> (i32, i32) {
    %c0_i32 = arith.constant 0 : i32
    return %arg0, %arg1 : i32, i32
  }
}

</mosaic_0001>

<llo_original>
// kernel: tpu_custom_call.1
$region0: #{tpu_custom_call.1}
  #allocation0 [shape = 'u32[]', space=smem, size = 0x4, offset = 0x4, fixed_abs, tag = 'smem constant byte address 0x4 - core index']
  #allocation1 [shape = 'u32[144,128]{1,0:T(1,128)}', space=vmem, size = 0x12000, scoped, tag = 'internal scratch']
  #allocation2 [shape = 'f32[4,128]{1,0:T(4,128)}', space=vmem, size = 0x800, scoped, tag = 'scratch operand']
  %s0 = inlined_call_operand.hbm [shape: f32[4,128], index: 0, kind: input, shape index: {}]
  %s1 = inlined_call_operand.hbm [shape: f32[128,128], index: 1, kind: input, shape index: {}]
  %s2 = inlined_call_operand.vmem [shape: f32[1,128], index: 2, kind: input, shape index: {}]
  %s3 = inlined_call_operand.hbm [shape: f32[4,128], index: 3, kind: output, shape index: {}]
  %s4 = sld [smem:[#allocation0]]
  $region38: #{tpu_custom_call.1} parent=0
    _
  %s6 = ssub.s32 1, %s4
  %s7 = scalar_select 0, %s6, %s4
  $region1: #{tpu_custom_call.1} parent=0
    #allocation3 [shape = 'u8[2048]{0}', space=vmem, size = 0x800, scoped, tag = 'input window, operand 0, single buffered']
    #allocation4 [shape = 's32[1]{0}', space=sflag, size = 0x4, scoped, tag = 'scoped memory for tpu_custom_call.1']
    #allocation5 [shape = 's32[1]{0}', space=sflag, size = 0x4, scoped, tag = 'scoped memory for tpu_custom_call.1']
    #allocation6 [shape = 'u8[65536]{0}', space=vmem, size = 0x10000, scoped, tag = 'input window, operand 1, single buffered']
    #allocation7 [shape = 's32[1]{0}', space=sflag, size = 0x4, scoped, tag = 'scoped memory for tpu_custom_call.1']
    #allocation8 [shape = 'u8[2048]{0}', space=vmem, size = 0x800, scoped, tag = 'output window, operand 0, single buffered']
    %8 = vsyncpa [#allocation4], 0
    %9 = vsyncpa [#allocation7], 0
    %10 = vsyncpa [#allocation5], 0
    // Predicated region
    $region2: #{tpu_custom_call.1} parent=1 // pred_check
      _
    $region3: #{tpu_custom_call.1} parent=1 // pred_check_branch
      %12 = sbr.rel (0) target = $region5
    $region4: #{tpu_custom_call.1} parent=1 // pred_region
      %s14 = ssub.s32 64, 64
      %15 = vsyncadd [#allocation4], %s14
      %s17 = sshll.u32 [#allocation3], 4
      %s18 = int_to_ptr.vmem [resolvable:$true] %s17
      %20 = dma.hbm_to_vmem [thread:$0]  %s0, 64, %s18, [#allocation4]
    $region5: #{tpu_custom_call.1} parent=1 // pred_fallthru
      _
    // Predicated region
    $region6: #{tpu_custom_call.1} parent=1 // pred_check
      _
    $region7: #{tpu_custom_call.1} parent=1 // pred_check_branch
      %22 = sbr.rel (0) target = $region9
    $region8: #{tpu_custom_call.1} parent=1 // pred_region
      %s24 = ssub.s32 2048, 2048
      %25 = vsyncadd [#allocation7], %s24
      %s26 = sshll.u32 [#allocation6], 4
      %s27 = int_to_ptr.vmem [resolvable:$true] %s26
      %32 = dma.hbm_to_vmem [thread:$0]  %s1, 2048, %s27, [#allocation7], 128, 128, 8
    $region9: #{tpu_custom_call.1} parent=1 // pred_fallthru
      _
    // Predicated region
    $region10: #{tpu_custom_call.1} parent=1 // pred_check
      _
    $region11: #{tpu_custom_call.1} parent=1 // pred_check_branch
      %34 = sbr.rel (0) target = $region13
    $region12: #{tpu_custom_call.1} parent=1 // pred_region
      _
    $region13: #{tpu_custom_call.1} parent=1 // pred_fallthru
      _
    // Predicated region
    $region14: #{tpu_custom_call.1} parent=1 // pred_check
      _
    $region15: #{tpu_custom_call.1} parent=1 // pred_check_branch
      %36 = sbr.rel (0) target = $region17
    $region16: #{tpu_custom_call.1} parent=1 // pred_region
      %37 = dma.done [#allocation4], 64
    $region17: #{tpu_custom_call.1} parent=1 // pred_fallthru
      _
    // Predicated region
    $region18: #{tpu_custom_call.1} parent=1 // pred_check
      _
    $region19: #{tpu_custom_call.1} parent=1 // pred_check_branch
      %39 = sbr.rel (0) target = $region21
    $region20: #{tpu_custom_call.1} parent=1 // pred_region
      %40 = dma.done [#allocation7], 2048
    $region21: #{tpu_custom_call.1} parent=1 // pred_fallthru
      _
    %p41 = scmp.eq.s32.totalorder 0, 0
    // Predicated region
    $region22: #{tpu_custom_call.1} parent=1 // pred_check
      %p42 = pneg %p41
    $region23: #{tpu_custom_call.1} parent=1 // pred_check_branch
      %44 = sbr.rel (%p42) target = $region25
    $region24: #{tpu_custom_call.1} parent=1 // pred_region
      %45 = vst [vmem:[#allocation2] sm:$0xf] 0.0
    $region25: #{tpu_custom_call.1} parent=1 // pred_fallthru
      _
    %v46 = vld [vmem:[#allocation6] sm:$0xff]
    %v47 = vld [vmem:[#allocation6 + $0x8] sm:$0xff]
    %v48 = vld [vmem:[#allocation6 + $0x10] sm:$0xff]
    %v49 = vld [vmem:[#allocation6 + $0x18] sm:$0xff]
    %v50 = vld [vmem:[#allocation6 + $0x20] sm:$0xff]
    %v51 = vld [vmem:[#allocation6 + $0x28] sm:$0xff]
    %v52 = vld [vmem:[#allocation6 + $0x30] sm:$0xff]
    %v53 = vld [vmem:[#allocation6 + $0x38] sm:$0xff]
    %v54 = vld [vmem:[#allocation6 + $0x40] sm:$0xff]
    %v55 = vld [vmem:[#allocation6 + $0x48] sm:$0xff]
    %v56 = vld [vmem:[#allocation6 + $0x50] sm:$0xff]
    %v57 = vld [vmem:[#allocation6 + $0x58] sm:$0xff]
    %v58 = vld [vmem:[#allocation6 + $0x60] sm:$0xff]
    %v59 = vld [vmem:[#allocation6 + $0x68] sm:$0xff]
    %v60 = vld [vmem:[#allocation6 + $0x70] sm:$0xff]
    %v61 = vld [vmem:[#allocation6 + $0x78] sm:$0xff]
    %v62 = vld [vmem:[#allocation2] sm:$0xf]
    %v63 = vld [vmem:[#allocation3] sm:$0xf]
    %64 = vmatprep.subr.mxu0 0.0
    %65 = vmatpush1.msra.mxu0 %v46
    %66 = vmatprep.subr.mxu0 0.0
    %67 = vmatpush1.msra.mxu0 %v47
    %68 = vmatprep.subr.mxu0 0.0
    %69 = vmatpush1.msra.mxu0 %v48
    %70 = vmatprep.subr.mxu0 0.0
    %71 = vmatpush1.msra.mxu0 %v49
    %72 = vmatprep.subr.mxu0 0.0
    %73 = vmatpush1.msra.mxu0 %v50
    %74 = vmatprep.subr.mxu0 0.0
    %75 = vmatpush1.msra.mxu0 %v51
    %76 = vmatprep.subr.mxu0 0.0
    %77 = vmatpush1.msra.mxu0 %v52
    %78 = vmatprep.subr.mxu0 0.0
    %79 = vmatpush1.msra.mxu0 %v53
    %80 = vmatprep.subr.mxu0 0.0
    %81 = vmatpush1.msra.mxu0 %v54
    %82 = vmatprep.subr.mxu0 0.0
    %83 = vmatpush1.msra.mxu0 %v55
    %84 = vmatprep.subr.mxu0 0.0
    %85 = vmatpush1.msra.mxu0 %v56
    %86 = vmatprep.subr.mxu0 0.0
    %87 = vmatpush1.msra.mxu0 %v57
    %88 = vmatprep.subr.mxu0 0.0
    %89 = vmatpush1.msra.mxu0 %v58
    %90 = vmatprep.subr.mxu0 0.0
    %91 = vmatpush1.msra.mxu0 %v59
    %92 = vmatprep.subr.mxu0 0.0
    %93 = vmatpush1.msra.mxu0 %v60
    %94 = vmatprep.subr.mxu0 0.0
    %95 = vmatpush1.msra.mxu0 %v61
    %96 = vmatprep.subr.mxu0 0.0
    %97 = vmatpush1.msra.mxu0 0.0
    %98 = vmatprep.subr.mxu0 0.0
    %99 = vmatpush1.msra.mxu0 0.0
    %100 = vmatprep.subr.mxu0 0.0
    %101 = vmatpush1.msra.mxu0 0.0
    %102 = vmatprep.subr.mxu0 0.0
    %103 = vmatpush1.msra.mxu0 0.0
    %104 = vmatprep.subr.mxu0 0.0
    %105 = vmatpush1.msra.mxu0 0.0
    %106 = vmatprep.subr.mxu0 0.0
    %107 = vmatpush1.msra.mxu0 0.0
    %108 = vmatprep.subr.mxu0 0.0
    %109 = vmatpush1.msra.mxu0 0.0
    %110 = vmatprep.subr.mxu0 0.0
    %111 = vmatpush1.msra.mxu0 0.0
    %112 = vmatprep.subr.mxu0 0.0
    %113 = vmatpush1.msra.mxu0 0.0
    %114 = vmatprep.subr.mxu0 0.0
    %115 = vmatpush1.msra.mxu0 0.0
    %116 = vmatprep.subr.mxu0 0.0
    %117 = vmatpush1.msra.mxu0 0.0
    %118 = vmatprep.subr.mxu0 0.0
    %119 = vmatpush1.msra.mxu0 0.0
    %120 = vmatprep.subr.mxu0 0.0
    %121 = vmatpush1.msra.mxu0 0.0
    %122 = vmatprep.subr.mxu0 0.0
    %123 = vmatpush1.msra.mxu0 0.0
    %124 = vmatprep.subr.mxu0 0.0
    %125 = vmatpush1.msra.mxu0 0.0
    %126 = vmatprep.subr.mxu0 0.0
    %127 = vmatpush1.msra.mxu0 0.0
    %128 = vmatprep.mubr.f32.mxu0 0.0
    %129 = vmatmul.mubr.f32.gmra.mrb[0].mxu0 %v63
    %v130 = vpop.f32.mrb[0].mxu0
    %v131 = vadd.f32 0.0, %v130
    %v132 = vpop.f32.mrb[0].mxu0
    %133 = vdwg.mxu0
    %v134 = vadd.f32 %v62, %v131
    %135 = vst [vmem:[#allocation2] sm:$0xf] %v134
    // Predicated region
    $region26: #{tpu_custom_call.1} parent=1 // pred_check
      %p136 = pneg %p41
    $region27: #{tpu_custom_call.1} parent=1 // pred_check_branch
      %138 = sbr.rel (%p136) target = $region29
    $region28: #{tpu_custom_call.1} parent=1 // pred_region
      %v139 = vld [vmem:[#allocation2] sm:$0xf]
      %v140 = vld [vmem:[%s2] sm:$0x1]
      %v142 = vlaneseq
      %v143 = vshrl.u32 %v142, 7
      %v144 = vsub.s32 0, %v143
      %v145 = vrot.slane %v140, %v144
      %v147 = vadd.f32 %v139, %v145
      %148 = vst [vmem:[#allocation8] sm:$0xf] %v147
    $region29: #{tpu_custom_call.1} parent=1 // pred_fallthru
      _
    // Predicated region
    $region30: #{tpu_custom_call.1} parent=1 // pred_check
      _
    $region31: #{tpu_custom_call.1} parent=1 // pred_check_branch
      %150 = sbr.rel (0) target = $region33
    $region32: #{tpu_custom_call.1} parent=1 // pred_region
      %s152 = ssub.s32 64, 64
      %153 = vsyncadd [#allocation5], %s152
      %s155 = sshll.u32 [#allocation8], 4
      %s156 = int_to_ptr.vmem [resolvable:$true] %s155
      %158 = dma.vmem_to_hbm [thread:$0]  %s156, 64, %s3, [#allocation5]
    $region33: #{tpu_custom_call.1} parent=1 // pred_fallthru
      _
    // Predicated region
    $region34: #{tpu_custom_call.1} parent=1 // pred_check
      _
    $region35: #{tpu_custom_call.1} parent=1 // pred_check_branch
      %160 = sbr.rel (0) target = $region37
    $region36: #{tpu_custom_call.1} parent=1 // pred_region
      %161 = dma.done [#allocation5], 64
    $region37: #{tpu_custom_call.1} parent=1 // pred_fallthru
      _
    %162 = vsyncpa [#allocation4], 1
    %163 = vsyncpa [#allocation7], 1
    %164 = vsyncpa [#allocation5], 1

</llo_original>
